<compile_context>
chip_gen: v7x
topology: tpu7x:2x2x1
jax: 0.10.0
libtpu: 0.0.40
codegen_flags: <defaults>
</compile_context>

<pallas_src>
import jax
import jax.numpy as jnp
from jax.experimental import pallas as pl
from jax.experimental.pallas import tpu as pltpu

HL = 5          # hidden layer size (hl in the PyTorch script)
IN_DIM = 16
OUT_DIM = 3


def _round_up(n, m):
    return ((n + m - 1) // m) * m


def mlp_kernel(x_ref, w1_ref, b1_ref, w2_ref, b2_ref, o_ref):
    """Fused fc1 -> ReLU -> fc2 on one (TB, IN_DIM) batch tile."""
    x = x_ref[...]                                                   # (TB, 16)
    # fc1 (MXU, f32 accumulate) + bias + ReLU (VPU, under DMA slack)
    h = jnp.dot(x, w1_ref[...], preferred_element_type=jnp.float32)  # (TB, HL)
    h = jnp.maximum(h + b1_ref[...], 0.0)
    # fc2
    y = jnp.dot(h.astype(w2_ref.dtype), w2_ref[...],
                preferred_element_type=jnp.float32)                  # (TB, 3)
    y = y + b2_ref[...]
    o_ref[...] = y.astype(o_ref.dtype)


def net_forward(x, w1, b1, w2, b2, *, block_batch=512):
    """x: (B, 16); w1: (HL, 16); b1: (HL,); w2: (3, HL); b2: (3,).

    Weight shapes follow nn.Linear's (out_features, in_features) convention;
    transposition to (in, out) is plain-JAX glue outside the kernel.
    """
    B = x.shape[0]

    # Batch tile: multiple of 8 sublanes, capped at block_batch rows.
    TB = min(block_batch, _round_up(B, 8))
    Bp = _round_up(B, TB)
    if Bp != B:
        x = jnp.pad(x, ((0, Bp - B), (0, 0)))
    grid = (Bp // TB,)

    w1_t = w1.T                        # (16, HL)
    w2_t = w2.T                        # (HL, 3)
    b1_2d = b1.reshape(1, HL)          # 2-D for TPU-friendly broadcasting
    b2_2d = b2.reshape(1, OUT_DIM)

    out = pl.pallas_call(
        mlp_kernel,
        out_shape=jax.ShapeDtypeStruct((Bp, OUT_DIM), x.dtype),
        grid=grid,
        in_specs=[
            # batch-tiled activations (double-buffered by the pipeline)
            pl.BlockSpec((TB, IN_DIM), lambda i: (i, 0)),
            # weights / biases: constant block index -> VMEM-resident, no re-DMA
            pl.BlockSpec((IN_DIM, HL), lambda i: (0, 0)),
            pl.BlockSpec((1, HL), lambda i: (0, 0)),
            pl.BlockSpec((HL, OUT_DIM), lambda i: (0, 0)),
            pl.BlockSpec((1, OUT_DIM), lambda i: (0, 0)),
        ],
        out_specs=pl.BlockSpec((TB, OUT_DIM), lambda i: (i, 0)),
        compiler_params=pltpu.CompilerParams(
            dimension_semantics=("parallel",)),
    )(x, w1_t, b1_2d, w2_t, b2_2d)

    return out[:B]


def _reference(x, w1, b1, w2, b2):
    return jnp.maximum(x @ w1.T + b1, 0.0) @ w2.T + b2


if __name__ == "__main__":
    key = jax.random.PRNGKey(0)
    kx, kw1, kb1, kw2, kb2 = jax.random.split(key, 5)

    # Deterministic parameter init (shapes from nn.Linear(16, hl), nn.Linear(hl, 3)).
    w1 = jax.random.uniform(kw1, (HL, IN_DIM), dtype=jnp.float32,
                            minval=-1.0 / jnp.sqrt(IN_DIM), maxval=1.0 / jnp.sqrt(IN_DIM))
    b1 = jax.random.uniform(kb1, (HL,), dtype=jnp.float32,
                            minval=-1.0 / jnp.sqrt(IN_DIM), maxval=1.0 / jnp.sqrt(IN_DIM))
    w2 = jax.random.uniform(kw2, (OUT_DIM, HL), dtype=jnp.float32,
                            minval=-1.0 / jnp.sqrt(HL), maxval=1.0 / jnp.sqrt(HL))
    b2 = jax.random.uniform(kb2, (OUT_DIM,), dtype=jnp.float32,
                            minval=-1.0 / jnp.sqrt(HL), maxval=1.0 / jnp.sqrt(HL))

    # Small batch (single grid step).
    batch = 8
    x_small = jax.random.normal(kx, (batch, IN_DIM), dtype=jnp.float32)
    out_small = net_forward(x_small, w1, b1, w2, b2)
    jax.block_until_ready(out_small)
    assert out_small.shape == (batch, OUT_DIM)
    assert jnp.allclose(out_small, _reference(x_small, w1, b1, w2, b2),
                        atol=1e-5, rtol=1e-5)

    # Larger, non-multiple-of-tile batch: exercises the batch grid + padding path.
    batch_big = 1032
    x_big = jax.random.normal(kx, (batch_big, IN_DIM), dtype=jnp.float32)
    out_big = net_forward(x_big, w1, b1, w2, b2)
    jax.block_until_ready(out_big)
    assert out_big.shape == (batch_big, OUT_DIM)
    assert jnp.allclose(out_big, _reference(x_big, w1, b1, w2, b2),
                        atol=1e-5, rtol=1e-5)

    print("KERNEL_OK")
</pallas_src>

<mosaic_0001>
module attributes {stable_mosaic.version = 11 : i64} {
  func.func @mlp_kernel(%arg0: i32, %arg1: memref<8x16xf32, #tpu.memory_space<vmem>>, %arg2: memref<16x5xf32, #tpu.memory_space<vmem>>, %arg3: memref<1x5xf32, #tpu.memory_space<vmem>>, %arg4: memref<5x3xf32, #tpu.memory_space<vmem>>, %arg5: memref<1x3xf32, #tpu.memory_space<vmem>>, %arg6: memref<8x3xf32, #tpu.memory_space<vmem>>) attributes {dimension_semantics = [#tpu.dimension_semantics<parallel>], iteration_bounds = array<i64: 1>, scalar_prefetch = 0 : i64, scratch_operands = 0 : i64, tpu.core_type = #tpu.core_type<tc>, window_params = [{transform_indices = @transform_0, window_bounds = array<i64: 8, 16>}, {pipeline_mode = #tpu.pipeline_mode<synchronous>, transform_indices = @transform_1, window_bounds = array<i64: 16, 5>}, {pipeline_mode = #tpu.pipeline_mode<synchronous>, transform_indices = @transform_2, window_bounds = array<i64: 1, 5>}, {pipeline_mode = #tpu.pipeline_mode<synchronous>, transform_indices = @transform_3, window_bounds = array<i64: 5, 3>}, {pipeline_mode = #tpu.pipeline_mode<synchronous>, transform_indices = @transform_4, window_bounds = array<i64: 1, 3>}, {transform_indices = @transform_5, window_bounds = array<i64: 8, 3>}]} {
    %c0 = arith.constant 0 : index
    %c0_0 = arith.constant 0 : index
    %0 = vector.load %arg1[%c0, %c0_0] : memref<8x16xf32, #tpu.memory_space<vmem>>, vector<8x16xf32>
    %c0_1 = arith.constant 0 : index
    %c0_2 = arith.constant 0 : index
    %1 = vector.load %arg2[%c0_1, %c0_2] : memref<16x5xf32, #tpu.memory_space<vmem>>, vector<16x5xf32>
    %cst = arith.constant dense<0.000000e+00> : vector<8x5xf32>
    %2 = tpu.matmul %0, %1, %cst {dimension_numbers = #tpu.dot_dimension_numbers<[1], [0], [0], [1], [0, 0, 1, 1], [], []>} : vector<8x16xf32>, vector<16x5xf32>, vector<8x5xf32> -> vector<8x5xf32>
    %c0_3 = arith.constant 0 : index
    %c0_4 = arith.constant 0 : index
    %3 = vector.load %arg3[%c0_3, %c0_4] : memref<1x5xf32, #tpu.memory_space<vmem>>, vector<1x5xf32>
    %4 = vector.broadcast %3 : vector<1x5xf32> to vector<8x5xf32>
    %5 = arith.addf %2, %4 : vector<8x5xf32>
    %cst_5 = arith.constant 0.000000e+00 : f32
    %6 = vector.broadcast %cst_5 : f32 to vector<8x5xf32>
    %7 = arith.maximumf %5, %6 : vector<8x5xf32>
    %c0_6 = arith.constant 0 : index
    %c0_7 = arith.constant 0 : index
    %8 = vector.load %arg4[%c0_6, %c0_7] : memref<5x3xf32, #tpu.memory_space<vmem>>, vector<5x3xf32>
    %cst_8 = arith.constant dense<0.000000e+00> : vector<8x3xf32>
    %9 = tpu.matmul %7, %8, %cst_8 {dimension_numbers = #tpu.dot_dimension_numbers<[1], [0], [0], [1], [0, 0, 1, 1], [], []>} : vector<8x5xf32>, vector<5x3xf32>, vector<8x3xf32> -> vector<8x3xf32>
    %c0_9 = arith.constant 0 : index
    %c0_10 = arith.constant 0 : index
    %10 = vector.load %arg5[%c0_9, %c0_10] : memref<1x3xf32, #tpu.memory_space<vmem>>, vector<1x3xf32>
    %11 = vector.broadcast %10 : vector<1x3xf32> to vector<8x3xf32>
    %12 = arith.addf %9, %11 : vector<8x3xf32>
    %c0_11 = arith.constant 0 : index
    %c0_12 = arith.constant 0 : index
    %13 = vector.load %arg6[%c0_11, %c0_12] : memref<8x3xf32, #tpu.memory_space<vmem>>, vector<8x3xf32>
    tpu.vector_store %arg6[%c0_11, %c0_12], %12 {strides = array<i32>} : memref<8x3xf32, #tpu.memory_space<vmem>>, vector<8x3xf32>,
    return
  }
  func.func @transform_0(%arg0: i32) -> (i32, i32) {
    %c0_i32 = arith.constant 0 : i32
    %c0_i32_0 = arith.constant 0 : i32
    return %arg0, %c0_i32 : i32, i32
  }
  func.func @transform_1(%arg0: i32) -> (i32, i32) {
    %c0_i32 = arith.constant 0 : i32
    %c0_i32_0 = arith.constant 0 : i32
    %c0_i32_1 = arith.constant 0 : i32
    return %c0_i32, %c0_i32_0 : i32, i32
  }
  func.func @transform_2(%arg0: i32) -> (i32, i32) {
    %c0_i32 = arith.constant 0 : i32
    %c0_i32_0 = arith.constant 0 : i32
    %c0_i32_1 = arith.constant 0 : i32
    return %c0_i32, %c0_i32_0 : i32, i32
  }
  func.func @transform_3(%arg0: i32) -> (i32, i32) {
    %c0_i32 = arith.constant 0 : i32
    %c0_i32_0 = arith.constant 0 : i32
    %c0_i32_1 = arith.constant 0 : i32
    return %c0_i32, %c0_i32_0 : i32, i32
  }
  func.func @transform_4(%arg0: i32) -> (i32, i32) {
    %c0_i32 = arith.constant 0 : i32
    %c0_i32_0 = arith.constant 0 : i32
    %c0_i32_1 = arith.constant 0 : i32
    return %c0_i32, %c0_i32_0 : i32, i32
  }
  func.func @transform_5(%arg0: i32) -> (i32, i32) {
    %c0_i32 = arith.constant 0 : i32
    %c0_i32_0 = arith.constant 0 : i32
    return %arg0, %c0_i32 : i32, i32
  }
}

</mosaic_0001>

<llo_original>
// kernel: tpu_custom_call.1
$region0: #{tpu_custom_call.1}
  #allocation0 [shape = 'u32[]', space=smem, size = 0x4, offset = 0x4, fixed_abs, tag = 'smem constant byte address 0x4 - core index']
  #allocation1 [shape = 'u32[144,128]{1,0:T(1,128)}', space=vmem, size = 0x12000, scoped, tag = 'internal scratch']
  %s0 = inlined_call_operand.vmem [shape: f32[8,16], index: 0, kind: input, shape index: {}]
  %s1 = inlined_call_operand.vmem [shape: f32[16,5], index: 1, kind: input, shape index: {}]
  %s2 = inlined_call_operand.vmem [shape: f32[1,5], index: 2, kind: input, shape index: {}]
  %s3 = inlined_call_operand.vmem [shape: f32[5,3], index: 3, kind: input, shape index: {}]
  %s4 = inlined_call_operand.vmem [shape: f32[1,3], index: 4, kind: input, shape index: {}]
  %s5 = inlined_call_operand.vmem [shape: f32[8,3], index: 5, kind: output, shape index: {}]
  %s6 = sld [smem:[#allocation0]]
  $region30: #{tpu_custom_call.1} parent=0
    _
  %s8 = ssub.s32 1, %s6
  %s9 = scalar_select 0, %s8, %s6
  // Predicated region
  $region2: #{tpu_custom_call.1} parent=0 // pred_check
    _
  $region3: #{tpu_custom_call.1} parent=0 // pred_check_branch
    %11 = sbr.rel (0) target = $region5
  $region4: #{tpu_custom_call.1} parent=0 // pred_region
    _
  $region5: #{tpu_custom_call.1} parent=0 // pred_fallthru
    _
  // Predicated region
  $region6: #{tpu_custom_call.1} parent=0 // pred_check
    _
  $region7: #{tpu_custom_call.1} parent=0 // pred_check_branch
    %13 = sbr.rel (0) target = $region9
  $region8: #{tpu_custom_call.1} parent=0 // pred_region
    _
  $region9: #{tpu_custom_call.1} parent=0 // pred_fallthru
    _
  // Predicated region
  $region10: #{tpu_custom_call.1} parent=0 // pred_check
    _
  $region11: #{tpu_custom_call.1} parent=0 // pred_check_branch
    %15 = sbr.rel (0) target = $region13
  $region12: #{tpu_custom_call.1} parent=0 // pred_region
    _
  $region13: #{tpu_custom_call.1} parent=0 // pred_fallthru
    _
  // Predicated region
  $region14: #{tpu_custom_call.1} parent=0 // pred_check
    _
  $region15: #{tpu_custom_call.1} parent=0 // pred_check_branch
    %17 = sbr.rel (0) target = $region17
  $region16: #{tpu_custom_call.1} parent=0 // pred_region
    _
  $region17: #{tpu_custom_call.1} parent=0 // pred_fallthru
    _
  // Predicated region
  $region18: #{tpu_custom_call.1} parent=0 // pred_check
    _
  $region19: #{tpu_custom_call.1} parent=0 // pred_check_branch
    %19 = sbr.rel (0) target = $region21
  $region20: #{tpu_custom_call.1} parent=0 // pred_region
    _
  $region21: #{tpu_custom_call.1} parent=0 // pred_fallthru
    _
  %v20 = vld [vmem:[%s0] sm:$0xff]
  %v21 = vld [vmem:[%s1] sm:$0xff]
  %v22 = vld [vmem:[%s1 + $0x8] sm:$0xff]
  %v23 = vld [vmem:[%s2] sm:$0x1]
  %v25 = vlaneseq
  %v26 = vshrl.u32 %v25, 7
  %v27 = vsub.s32 0, %v26
  %v28 = vrot.slane %v23, %v27
  %vm30 = vcmask 130048
  %v32 = vsel %vm30, %v20, 0
  %34 = vmatprep.subr.mxu0 0.0
  %35 = vmatpush1.msra.mxu0 %v21
  %36 = vmatprep.subr.mxu0 0.0
  %37 = vmatpush1.msra.mxu0 %v22
  %38 = vmatprep.subr.mxu0 0.0
  %39 = vmatpush1.msra.mxu0 0.0
  %40 = vmatprep.subr.mxu0 0.0
  %41 = vmatpush1.msra.mxu0 0.0
  %42 = vmatprep.subr.mxu0 0.0
  %43 = vmatpush1.msra.mxu0 0.0
  %44 = vmatprep.subr.mxu0 0.0
  %45 = vmatpush1.msra.mxu0 0.0
  %46 = vmatprep.subr.mxu0 0.0
  %47 = vmatpush1.msra.mxu0 0.0
  %48 = vmatprep.subr.mxu0 0.0
  %49 = vmatpush1.msra.mxu0 0.0
  %50 = vmatprep.subr.mxu0 0.0
  %51 = vmatpush1.msra.mxu0 0.0
  %52 = vmatprep.subr.mxu0 0.0
  %53 = vmatpush1.msra.mxu0 0.0
  %54 = vmatprep.subr.mxu0 0.0
  %55 = vmatpush1.msra.mxu0 0.0
  %56 = vmatprep.subr.mxu0 0.0
  %57 = vmatpush1.msra.mxu0 0.0
  %58 = vmatprep.subr.mxu0 0.0
  %59 = vmatpush1.msra.mxu0 0.0
  %60 = vmatprep.subr.mxu0 0.0
  %61 = vmatpush1.msra.mxu0 0.0
  %62 = vmatprep.subr.mxu0 0.0
  %63 = vmatpush1.msra.mxu0 0.0
  %64 = vmatprep.subr.mxu0 0.0
  %65 = vmatpush1.msra.mxu0 0.0
  %66 = vmatprep.subr.mxu0 0.0
  %67 = vmatpush1.msra.mxu0 0.0
  %68 = vmatprep.subr.mxu0 0.0
  %69 = vmatpush1.msra.mxu0 0.0
  %70 = vmatprep.subr.mxu0 0.0
  %71 = vmatpush1.msra.mxu0 0.0
  %72 = vmatprep.subr.mxu0 0.0
  %73 = vmatpush1.msra.mxu0 0.0
  %74 = vmatprep.subr.mxu0 0.0
  %75 = vmatpush1.msra.mxu0 0.0
  %76 = vmatprep.subr.mxu0 0.0
  %77 = vmatpush1.msra.mxu0 0.0
  %78 = vmatprep.subr.mxu0 0.0
  %79 = vmatpush1.msra.mxu0 0.0
  %80 = vmatprep.subr.mxu0 0.0
  %81 = vmatpush1.msra.mxu0 0.0
  %82 = vmatprep.subr.mxu0 0.0
  %83 = vmatpush1.msra.mxu0 0.0
  %84 = vmatprep.subr.mxu0 0.0
  %85 = vmatpush1.msra.mxu0 0.0
  %86 = vmatprep.subr.mxu0 0.0
  %87 = vmatpush1.msra.mxu0 0.0
  %88 = vmatprep.subr.mxu0 0.0
  %89 = vmatpush1.msra.mxu0 0.0
  %90 = vmatprep.subr.mxu0 0.0
  %91 = vmatpush1.msra.mxu0 0.0
  %92 = vmatprep.subr.mxu0 0.0
  %93 = vmatpush1.msra.mxu0 0.0
  %94 = vmatprep.subr.mxu0 0.0
  %95 = vmatpush1.msra.mxu0 0.0
  %96 = vmatprep.subr.mxu0 0.0
  %97 = vmatpush1.msra.mxu0 0.0
  %98 = vmatprep.mubr.f32.mxu0 0.0
  %99 = vmatmul.mubr.f32.gmra.mrb[0].mxu0 %v32
  %v100 = vpop.f32.mrb[0].mxu0
  %v101 = vadd.f32 %v28, %v100
  %v102 = vpop.f32.mrb[0].mxu0
  %103 = vdwg.mxu0
  %v104 = vmax.f32 %v101, 0.0
  %v105 = vld [vmem:[%s3] sm:$0x1f]
  %v106 = vld [vmem:[%s4] sm:$0x1]
  %v108 = vlaneseq
  %v109 = vshrl.u32 %v108, 7
  %v110 = vsub.s32 0, %v109
  %v111 = vrot.slane %v106, %v110
  %vm113 = vcmask 39936
  %v115 = vsel %vm113, %v104, 0
  %vm117 = vcmask 1044480
  %v119 = vsel %vm117, %v105, 0
  %121 = vmatprep.subr.mxu0 0.0
  %122 = vmatpush1.msra.mxu0 %v119
  %123 = vmatprep.subr.mxu0 0.0
  %124 = vmatpush1.msra.mxu0 0.0
  %125 = vmatprep.subr.mxu0 0.0
  %126 = vmatpush1.msra.mxu0 0.0
  %127 = vmatprep.subr.mxu0 0.0
  %128 = vmatpush1.msra.mxu0 0.0
  %129 = vmatprep.subr.mxu0 0.0
  %130 = vmatpush1.msra.mxu0 0.0
  %131 = vmatprep.subr.mxu0 0.0
  %132 = vmatpush1.msra.mxu0 0.0
  %133 = vmatprep.subr.mxu0 0.0
  %134 = vmatpush1.msra.mxu0 0.0
  %135 = vmatprep.subr.mxu0 0.0
  %136 = vmatpush1.msra.mxu0 0.0
  %137 = vmatprep.subr.mxu0 0.0
  %138 = vmatpush1.msra.mxu0 0.0
  %139 = vmatprep.subr.mxu0 0.0
  %140 = vmatpush1.msra.mxu0 0.0
  %141 = vmatprep.subr.mxu0 0.0
  %142 = vmatpush1.msra.mxu0 0.0
  %143 = vmatprep.subr.mxu0 0.0
  %144 = vmatpush1.msra.mxu0 0.0
  %145 = vmatprep.subr.mxu0 0.0
  %146 = vmatpush1.msra.mxu0 0.0
  %147 = vmatprep.subr.mxu0 0.0
  %148 = vmatpush1.msra.mxu0 0.0
  %149 = vmatprep.subr.mxu0 0.0
  %150 = vmatpush1.msra.mxu0 0.0
  %151 = vmatprep.subr.mxu0 0.0
  %152 = vmatpush1.msra.mxu0 0.0
  %153 = vmatprep.subr.mxu0 0.0
  %154 = vmatpush1.msra.mxu0 0.0
  %155 = vmatprep.subr.mxu0 0.0
  %156 = vmatpush1.msra.mxu0 0.0
  %157 = vmatprep.subr.mxu0 0.0
  %158 = vmatpush1.msra.mxu0 0.0
  %159 = vmatprep.subr.mxu0 0.0
  %160 = vmatpush1.msra.mxu0 0.0
  %161 = vmatprep.subr.mxu0 0.0
  %162 = vmatpush1.msra.mxu0 0.0
  %163 = vmatprep.subr.mxu0 0.0
  %164 = vmatpush1.msra.mxu0 0.0
  %165 = vmatprep.subr.mxu0 0.0
  %166 = vmatpush1.msra.mxu0 0.0
  %167 = vmatprep.subr.mxu0 0.0
  %168 = vmatpush1.msra.mxu0 0.0
  %169 = vmatprep.subr.mxu0 0.0
  %170 = vmatpush1.msra.mxu0 0.0
  %171 = vmatprep.subr.mxu0 0.0
  %172 = vmatpush1.msra.mxu0 0.0
  %173 = vmatprep.subr.mxu0 0.0
  %174 = vmatpush1.msra.mxu0 0.0
  %175 = vmatprep.subr.mxu0 0.0
  %176 = vmatpush1.msra.mxu0 0.0
  %177 = vmatprep.subr.mxu0 0.0
  %178 = vmatpush1.msra.mxu0 0.0
  %179 = vmatprep.subr.mxu0 0.0
  %180 = vmatpush1.msra.mxu0 0.0
  %181 = vmatprep.subr.mxu0 0.0
  %182 = vmatpush1.msra.mxu0 0.0
  %183 = vmatprep.subr.mxu0 0.0
  %184 = vmatpush1.msra.mxu0 0.0
  %185 = vmatprep.mubr.f32.mxu0 0.0
  %186 = vmatmul.mubr.f32.gmra.mrb[0].mxu0 %v115
  %v187 = vpop.f32.mrb[0].mxu0
  %v188 = vadd.f32 %v111, %v187
  %v189 = vpop.f32.mrb[0].mxu0
  %190 = vdwg.mxu0
  %vm191 = vcmask 23552
  %192 = vst.msk [vmem:[%s5] sm:$0xff] %vm191, %v188
  // Predicated region
  $region22: #{tpu_custom_call.1} parent=0 // pred_check
    _
  $region23: #{tpu_custom_call.1} parent=0 // pred_check_branch
    %194 = sbr.rel (0) target = $region25
  $region24: #{tpu_custom_call.1} parent=0 // pred_region
    _
  $region25: #{tpu_custom_call.1} parent=0 // pred_fallthru
    _
  // Predicated region
  $region26: #{tpu_custom_call.1} parent=0 // pred_check
    _
  $region27: #{tpu_custom_call.1} parent=0 // pred_check_branch
    %196 = sbr.rel (0) target = $region29
  $region28: #{tpu_custom_call.1} parent=0 // pred_region
    _
  $region29: #{tpu_custom_call.1} parent=0 // pred_fallthru
    _

</llo_original>
